<compile_context>
chip_gen: v6e
topology: v6e:2x2x1
jax: 0.10.0
libtpu: 0.0.40
codegen_flags: <defaults>
</compile_context>

<pallas_src>
import functools

import jax
import jax.numpy as jnp
from jax.experimental import pallas as pl
from jax.experimental.pallas import tpu as pltpu


def _rpl_kernel(*refs, has_bias: bool, use_acc: bool):
    """One (i, j, r, k) grid step of the fused row-parallel linear.

    Grid axes: i = token tile, j = out-feature tile, r = rank shard,
    k = K tile inside the rank shard.  Accumulating over (r, k) realizes the
    distnn.all_reduce of RowParallelLinear.
    """
    it = iter(refs)
    x_ref = next(it)                          # (1, tm, tk)
    w_ref = next(it)                          # (1, tn, tk)  -- native [out, in]
    b_ref = next(it) if has_bias else None    # (1, tn)
    o_ref = next(it)                          # (tm, tn)
    acc_ref = next(it) if use_acc else o_ref  # f32 scratch or resident output

    r = pl.program_id(2)
    k = pl.program_id(3)
    is_first = jnp.logical_and(r == 0, k == 0)
    is_last = jnp.logical_and(r == pl.num_programs(2) - 1,
                              k == pl.num_programs(3) - 1)

    # x[tm, tk] contracted against w[tn, tk] on its K axis (MXU handles the
    # transposed contraction natively; no wrapper-side transpose needed).
    prod = jax.lax.dot_general(
        x_ref[0], w_ref[0],
        dimension_numbers=(((1,), (1,)), ((), ())),
        preferred_element_type=jnp.float32,
    )

    @pl.when(is_first)
    def _():
        acc_ref[...] = prod            # overwrite; no zero-init + add

    @pl.when(jnp.logical_not(is_first))
    def _():
        acc_ref[...] += prod

    if has_bias or use_acc:
        @pl.when(is_last)
        def _():
            out = acc_ref[...]
            if has_bias:
                out = out + b_ref[...].astype(jnp.float32)
            o_ref[...] = out.astype(o_ref.dtype)


def _round_up(x: int, m: int) -> int:
    return -(-x // m) * m


def _pad_axis(a, axis, target):
    cur = a.shape[axis]
    if cur == target:
        return a
    pad = [(0, 0)] * a.ndim
    pad[axis] = (0, target - cur)
    return jnp.pad(a, pad)


def row_parallel_linear(x_shards, w_shards, bias=None, out_dtype=None,
                        tm_max=512, tn_max=512, tk_max=512):
    """RowParallelLinear.forward (F.linear + all_reduce path), all ranks fused
    into a single pallas_call on one host.

    x_shards : [R, ..., part_in]   per-rank activations, stacked on a leading
               rank axis (pass an already-stacked array to avoid any copy).
    w_shards : [R, out, part_in]   per-rank weights in native [out, in] layout.
    bias     : optional [out], added once after the reduction (fused in-kernel).
    Returns  : [..., out] = sum_r x_r @ W_r^T  (== all_reduce of rank outputs).
    """
    x_shards = jnp.asarray(x_shards)
    w_shards = jnp.asarray(w_shards)
    R, n_out, part_in = w_shards.shape
    assert x_shards.shape[0] == R and x_shards.shape[-1] == part_in
    lead_shape = x_shards.shape[1:-1]

    if out_dtype is None:
        out_dtype = x_shards.dtype
    out_dtype = jnp.dtype(out_dtype)
    use_acc = out_dtype != jnp.dtype(jnp.float32)   # f32 out -> accumulate in o_ref

    x3 = x_shards.reshape(R, -1, part_in)
    T = x3.shape[1]

    # --- tile selection: MXU-aligned tiles, zero-pad (never full-dim fallback) ---
    tm = min(tm_max, _round_up(T, 16))        # bf16 sublane packing => tm >= 16
    tn = min(tn_max, _round_up(n_out, 128))
    tk = min(tk_max, _round_up(part_in, 128))
    t_pad = _round_up(T, tm)
    n_pad = _round_up(n_out, tn)
    k_pad = _round_up(part_in, tk)

    gi, gj = t_pad // tm, n_pad // tn
    # Megacore (v7x: 2 TCs/chip): make at least one "parallel" axis extent >= 2.
    # Split the out-feature axis so each core fetches disjoint weight tiles.
    if gi == 1 and gj == 1 and tn % 256 == 0:
        tn //= 2
        gj = n_pad // tn
    grid = (gi, gj, R, k_pad // tk)

    # --- pad operands (zero K-padding contributes nothing to the reduction) ---
    x3 = _pad_axis(_pad_axis(x3, 1, t_pad), 2, k_pad)
    w3 = _pad_axis(_pad_axis(w_shards, 1, n_pad), 2, k_pad)

    has_bias = bias is not None
    operands = [x3, w3]
    in_specs = [
        pl.BlockSpec((1, tm, tk), lambda i, j, r, k: (r, i, k)),   # activations
        pl.BlockSpec((1, tn, tk), lambda i, j, r, k: (r, j, k)),   # weight [N, K]
    ]
    if has_bias:
        b2 = _pad_axis(jnp.asarray(bias, jnp.float32).reshape(1, n_out), 1, n_pad)
        operands.append(b2)
        in_specs.append(pl.BlockSpec((1, tn), lambda i, j, r, k: (0, j)))

    scratch_shapes = [pltpu.VMEM((tm, tn), jnp.float32)] if use_acc else []

    # --- VMEM budget: double-buffered inputs + resident output (+ scratch) ---
    xi = jnp.dtype(x3.dtype).itemsize
    wi = jnp.dtype(w3.dtype).itemsize
    oi = out_dtype.itemsize
    vmem_bytes = 2 * (tm * tk * xi + tn * tk * wi) + 2 * tm * tn * oi
    if use_acc:
        vmem_bytes += tm * tn * 4
    if has_bias:
        vmem_bytes += 2 * tn * 4
    vmem_limit = int(min(64 << 20, max(16 << 20, 2 * vmem_bytes + (2 << 20))))

    kernel = functools.partial(_rpl_kernel, has_bias=has_bias, use_acc=use_acc)

    y2d = pl.pallas_call(
        kernel,
        out_shape=jax.ShapeDtypeStruct((t_pad, n_pad), out_dtype),
        grid_spec=pltpu.PrefetchScalarGridSpec(
            num_scalar_prefetch=0,
            grid=grid,
            in_specs=in_specs,
            out_specs=pl.BlockSpec((tm, tn), lambda i, j, r, k: (i, j)),
            scratch_shapes=scratch_shapes,
        ),
        compiler_params=pltpu.CompilerParams(
            dimension_semantics=("parallel", "parallel", "arbitrary", "arbitrary"),
            vmem_limit_bytes=vmem_limit,
        ),
    )(*operands)

    y2d = y2d[:T, :n_out]
    return y2d.reshape(*lead_shape, n_out)


if __name__ == "__main__":
    world_size = 2
    in_features, out_features = 256, 256
    B, S = 2, 8
    part_in = in_features // world_size

    key = jax.random.PRNGKey(0)
    kx, kw, kb = jax.random.split(key, 3)
    x_full = jax.random.normal(kx, (B, S, in_features), jnp.float32).astype(jnp.bfloat16)
    weight_full = jax.random.normal(kw, (out_features, in_features), jnp.float32).astype(jnp.bfloat16)
    bias = jax.random.normal(kb, (out_features,), jnp.float32)

    # Per-rank shards, stacked on a leading rank axis (done once at setup).
    x_stacked = jnp.stack(
        [x_full[..., r * part_in:(r + 1) * part_in] for r in range(world_size)], axis=0)
    w_stacked = jnp.stack(
        [weight_full[:, r * part_in:(r + 1) * part_in] for r in range(world_size)], axis=0)

    # Reference: sum of per-rank F.linear outputs (== distnn.all_reduce), f32.
    ref = sum(
        jnp.dot(
            x_stacked[r].reshape(-1, part_in).astype(jnp.float32),
            w_stacked[r].T.astype(jnp.float32),
            precision=jax.lax.Precision.HIGHEST,
        )
        for r in range(world_size)
    ).reshape(B, S, out_features)

    # Path 1: f32 output, no bias (direct accumulation into o_ref, no scratch).
    y_f32 = row_parallel_linear(x_stacked, w_stacked, out_dtype=jnp.float32)
    jax.block_until_ready(y_f32)
    assert y_f32.shape == (B, S, out_features)
    assert jnp.allclose(y_f32, ref, atol=1e-2, rtol=1e-2), "f32 kernel output mismatch"

    # Path 2: bf16 output with fused bias (f32 VMEM accumulator + epilogue).
    y_bf16 = row_parallel_linear(x_stacked, w_stacked, bias=bias, out_dtype=jnp.bfloat16)
    jax.block_until_ready(y_bf16)
    assert y_bf16.shape == (B, S, out_features)
    assert jnp.allclose(y_bf16.astype(jnp.float32), ref + bias, atol=2e-2, rtol=2e-2), \
        "bf16+bias kernel output mismatch"

    print("KERNEL_OK")
</pallas_src>

<mosaic_0001>
module attributes {stable_mosaic.version = 11 : i64} {
  func.func @_rpl_kernel(%arg0: i32, %arg1: i32, %arg2: i32, %arg3: i32, %arg4: memref<1x16x128xbf16, #tpu.memory_space<vmem>>, %arg5: memref<1x128x128xbf16, #tpu.memory_space<vmem>>, %arg6: memref<16x128xf32, #tpu.memory_space<vmem>>) attributes {dimension_semantics = [#tpu.dimension_semantics<parallel>, #tpu.dimension_semantics<parallel>, #tpu.dimension_semantics<arbitrary>, #tpu.dimension_semantics<arbitrary>], iteration_bounds = array<i64: 1, 2, 2, 1>, scalar_prefetch = 0 : i64, scratch_operands = 0 : i64, tpu.core_type = #tpu.core_type<tc>, window_params = [{transform_indices = @transform_0, window_bounds = array<i64: 1, 16, 128>}, {transform_indices = @transform_1, window_bounds = array<i64: 1, 128, 128>}, {transform_indices = @transform_2, window_bounds = array<i64: 16, 128>}]} {
    %c0_i32 = arith.constant 0 : i32
    %0 = arith.cmpi eq, %arg2, %c0_i32 : i32
    %c0_i32_0 = arith.constant 0 : i32
    %1 = arith.cmpi eq, %arg3, %c0_i32_0 : i32
    %2 = arith.andi %0, %1 : i1
    %c0 = arith.constant 0 : index
    %c0_1 = arith.constant 0 : index
    %c0_2 = arith.constant 0 : index
    %3 = vector.load %arg4[%c0, %c0_1, %c0_2] : memref<1x16x128xbf16, #tpu.memory_space<vmem>>, vector<1x16x128xbf16>
    %4 = vector.shape_cast %3 : vector<1x16x128xbf16> to vector<16x128xbf16>
    %c0_3 = arith.constant 0 : index
    %c0_4 = arith.constant 0 : index
    %c0_5 = arith.constant 0 : index
    %5 = vector.load %arg5[%c0_3, %c0_4, %c0_5] : memref<1x128x128xbf16, #tpu.memory_space<vmem>>, vector<1x128x128xbf16>
    %6 = vector.shape_cast %5 : vector<1x128x128xbf16> to vector<128x128xbf16>
    %cst = arith.constant dense<0.000000e+00> : vector<16x128xf32>
    %7 = tpu.matmul %4, %6, %cst {dimension_numbers = #tpu.dot_dimension_numbers<[1], [1], [0], [0], [0, 0, 1, 0], [], []>} : vector<16x128xbf16>, vector<128x128xbf16>, vector<16x128xf32> -> vector<16x128xf32>
    %8 = arith.extui %2 : i1 to i32
    %c0_i32_6 = arith.constant 0 : i32
    %9 = arith.cmpi ne, %8, %c0_i32_6 : i32
    scf.if %9 {
      %c0_8 = arith.constant 0 : index
      %c0_9 = arith.constant 0 : index
      %13 = vector.load %arg6[%c0_8, %c0_9] : memref<16x128xf32, #tpu.memory_space<vmem>>, vector<16x128xf32>
      tpu.vector_store %arg6[%c0_8, %c0_9], %7 {strides = array<i32>} : memref<16x128xf32, #tpu.memory_space<vmem>>, vector<16x128xf32>,
    } else {
    }
    %true = arith.constant true
    %10 = arith.xori %2, %true : i1
    %11 = arith.extui %10 : i1 to i32
    %c0_i32_7 = arith.constant 0 : i32
    %12 = arith.cmpi ne, %11, %c0_i32_7 : i32
    scf.if %12 {
      %c0_8 = arith.constant 0 : index
      %c0_9 = arith.constant 0 : index
      %13 = vector.load %arg6[%c0_8, %c0_9] : memref<16x128xf32, #tpu.memory_space<vmem>>, vector<16x128xf32>
      %14 = arith.addf %13, %7 : vector<16x128xf32>
      %c0_10 = arith.constant 0 : index
      %c0_11 = arith.constant 0 : index
      %15 = vector.load %arg6[%c0_10, %c0_11] : memref<16x128xf32, #tpu.memory_space<vmem>>, vector<16x128xf32>
      tpu.vector_store %arg6[%c0_10, %c0_11], %14 {strides = array<i32>} : memref<16x128xf32, #tpu.memory_space<vmem>>, vector<16x128xf32>,
    } else {
    }
    return
  }
  func.func @transform_0(%arg0: i32, %arg1: i32, %arg2: i32, %arg3: i32) -> (i32, i32, i32) {
    %c0_i32 = arith.constant 0 : i32
    return %arg2, %arg0, %arg3 : i32, i32, i32
  }
  func.func @transform_1(%arg0: i32, %arg1: i32, %arg2: i32, %arg3: i32) -> (i32, i32, i32) {
    %c0_i32 = arith.constant 0 : i32
    return %arg2, %arg1, %arg3 : i32, i32, i32
  }
  func.func @transform_2(%arg0: i32, %arg1: i32, %arg2: i32, %arg3: i32) -> (i32, i32) {
    %c0_i32 = arith.constant 0 : i32
    return %arg0, %arg1 : i32, i32
  }
}

</mosaic_0001>

<llo_original>
// kernel: tpu_custom_call.1
$region0: #{tpu_custom_call.1}
  #allocation0 [shape = 'u32[]', space=smem, size = 0x4, offset = 0x4, fixed_abs, tag = 'smem constant byte address 0x4 - core index']
  #allocation1 [shape = 'u32[144,128]{1,0:T(1,128)}', space=vmem, size = 0x12000, scoped, tag = 'internal scratch']
  %s0 = inlined_call_operand.hbm [shape: bf16[2,16,128], index: 0, kind: input, shape index: {}]
  %s1 = inlined_call_operand.hbm [shape: bf16[2,256,128], index: 1, kind: input, shape index: {}]
  %s2 = inlined_call_operand.hbm [shape: f32[16,256], index: 2, kind: output, shape index: {}]
  %s3 = sld [smem:[#allocation0]]
  $region57: #{tpu_custom_call.1} parent=0
    _
  %s5 = ssub.s32 1, %s3
  %s6 = scalar_select 0, %s5, %s3
  $region1: #{tpu_custom_call.1} parent=0
    #allocation2 [shape = 'u8[8192]{0}', space=vmem, size = 0x2000, scoped, tag = 'input window, operand 0']
    #allocation3 [shape = 's32[2]{0}', space=sflag, size = 0x8, scoped, tag = 'scoped memory for tpu_custom_call.1']
    #allocation4 [shape = 's32[2]{0}', space=sflag, size = 0x8, scoped, tag = 'scoped memory for tpu_custom_call.1']
    #allocation5 [shape = 'u8[65536]{0}', space=vmem, size = 0x10000, scoped, tag = 'input window, operand 1']
    #allocation6 [shape = 's32[2]{0}', space=sflag, size = 0x8, scoped, tag = 'scoped memory for tpu_custom_call.1']
    #allocation7 [shape = 'u8[16384]{0}', space=vmem, size = 0x4000, scoped, tag = 'output window, operand 0']
    %7 = vsyncpa [#allocation3], 0
    %s8 = scalar_lea.sflag [#allocation3], 1
    %9 = vsyncpa %s8, 0
    %10 = vsyncpa [#allocation6], 0
    %s11 = scalar_lea.sflag [#allocation6], 1
    %12 = vsyncpa %s11, 0
    %13 = vsyncpa [#allocation4], 0
    %s14 = scalar_lea.sflag [#allocation4], 1
    %15 = vsyncpa %s14, 0
    loop: start=0, step=1, limit=6
    $region2: #{tpu_custom_call.1} parent=1 // loop_pre_header
      _
    $region3: #{tpu_custom_call.1} parent=1 // loop_header
      %s17 = sphi 0, %s21
      %p18 = scmp.ge.s32.totalorder %s17, 6
      %s24 = sphi 0, %s50
      %s25 = sphi 0, %s46
      %s26 = sphi 0, %s42
      %s27 = sphi 0, %s38
      %s28 = sphi 0, %s24
      %s29 = sphi 0, %s25
      %s30 = sphi 0, %s26
      %s31 = sphi 0, %s27
      %s32 = sphi 0, %s28
      %s33 = sphi 0, %s29
      %s34 = sphi 0, %s30
      %s35 = sphi 0, %s31
      %s57 = sphi 0, %s59
      %s60 = sphi 0, %s57
      %s61 = sphi 0, %s60
      %s77 = sphi 0, %s61
      %s87 = sphi 0, %s89
      %s90 = sphi 0, %s87
      %s91 = sphi 0, %s90
      %s107 = sphi 0, %s91
      %s115 = sphi 0, %s117
      %s118 = sphi 0, %s115
      %s119 = sphi 0, %s118
      %s135 = sphi 0, %s119
    $region4: #{tpu_custom_call.1} parent=1 // loop_header_branch
      %20 = sbr.rel (%p18) target = $region8
    $region5: #{tpu_custom_call.1} parent=1 // loop_body
      %s22 = ssub.s32 %s17, 1
      %s23 = ssub.s32 %s17, 2
      %s36 = sadd.s32 1, %s27
      %p37 = scmp.ge.s32.totalorder %s36, 1
      %s38 = scalar_select %p37, 0, %s36
      %s39 = sadd.s32 1, %s26
      %s40 = scalar_select %p37, %s39, %s26
      %p41 = scmp.ge.s32.totalorder %s40, 2
      %s42 = scalar_select %p41, 0, %s40
      %s43 = sadd.s32 1, %s25
      %s44 = scalar_select %p41, %s43, %s25
      %p45 = scmp.ge.s32.totalorder %s44, 2
      %s46 = scalar_select %p45, 0, %s44
      %s47 = sadd.s32 1, %s24
      %s48 = scalar_select %p45, %s47, %s24
      %p49 = scmp.ge.s32.totalorder %s48, 1
      %s50 = scalar_select %p49, 0, %s48
      %s51 = ssub.s32 %s26, %s42
      %s52 = ssub.s32 %s24, %s50
      %s53 = sor.u32 %s51, %s52
      %s54 = ssub.s32 %s27, %s38
      %s55 = sor.u32 %s53, %s54
      %p56 = scmp.eq.s32.totalorder %s55, 0
      %s58 = sadd.s32 %s57, 1
      %s59 = scalar_select %p56, %s57, %s58
      %p62 = pneg %p56
      %p63 = scmp.eq.s32.totalorder %s17, 3
      %p64 = por %p62, %p63
      %p65 = scmp.ne.s32.totalorder %s57, %s60
      %p66 = scmp.eq.s32.totalorder %s17, 0
      %p67 = por %p65, %p66
      %p68 = scmp.ne.s32.totalorder %s57, %s60
      %p69 = scmp.eq.s32.totalorder %s22, 3
      %p70 = por %p68, %p69
      %p71 = scmp.ne.s32.totalorder %s60, %s61
      %p72 = scmp.eq.s32.totalorder %s22, 0
      %p73 = por %p71, %p72
      %p74 = scmp.ne.s32.totalorder %s60, %s61
      %p75 = scmp.eq.s32.totalorder %s23, 3
      %p76 = por %p74, %p75
      %p78 = scmp.ne.s32.totalorder %s61, %s77
      %p79 = scmp.eq.s32.totalorder %s23, 0
      %p80 = por %p78, %p79
      %s81 = ssub.s32 %s26, %s42
      %s82 = ssub.s32 %s25, %s46
      %s83 = sor.u32 %s81, %s82
      %s84 = ssub.s32 %s27, %s38
      %s85 = sor.u32 %s83, %s84
      %p86 = scmp.eq.s32.totalorder %s85, 0
      %s88 = sadd.s32 %s87, 1
      %s89 = scalar_select %p86, %s87, %s88
      %p92 = pneg %p86
      %p93 = scmp.eq.s32.totalorder %s17, 3
      %p94 = por %p92, %p93
      %p95 = scmp.ne.s32.totalorder %s87, %s90
      %p96 = scmp.eq.s32.totalorder %s17, 0
      %p97 = por %p95, %p96
      %p98 = scmp.ne.s32.totalorder %s87, %s90
      %p99 = scmp.eq.s32.totalorder %s22, 3
      %p100 = por %p98, %p99
      %p101 = scmp.ne.s32.totalorder %s90, %s91
      %p102 = scmp.eq.s32.totalorder %s22, 0
      %p103 = por %p101, %p102
      %p104 = scmp.ne.s32.totalorder %s90, %s91
      %p105 = scmp.eq.s32.totalorder %s23, 3
      %p106 = por %p104, %p105
      %p108 = scmp.ne.s32.totalorder %s91, %s107
      %p109 = scmp.eq.s32.totalorder %s23, 0
      %p110 = por %p108, %p109
      %s111 = ssub.s32 %s24, %s50
      %s112 = ssub.s32 %s25, %s46
      %s113 = sor.u32 %s111, %s112
      %p114 = scmp.eq.s32.totalorder %s113, 0
      %s116 = sadd.s32 %s115, 1
      %s117 = scalar_select %p114, %s115, %s116
      %p120 = pneg %p114
      %p121 = scmp.eq.s32.totalorder %s17, 3
      %p122 = por %p120, %p121
      %p123 = scmp.ne.s32.totalorder %s115, %s118
      %p124 = scmp.eq.s32.totalorder %s17, 0
      %p125 = por %p123, %p124
      %p126 = scmp.ne.s32.totalorder %s115, %s118
      %p127 = scmp.eq.s32.totalorder %s22, 3
      %p128 = por %p126, %p127
      %p129 = scmp.ne.s32.totalorder %s118, %s119
      %p130 = scmp.eq.s32.totalorder %s22, 0
      %p131 = por %p129, %p130
      %p132 = scmp.ne.s32.totalorder %s118, %s119
      %p133 = scmp.eq.s32.totalorder %s23, 3
      %p134 = por %p132, %p133
      %p136 = scmp.ne.s32.totalorder %s119, %s135
      %p137 = scmp.eq.s32.totalorder %s23, 0
      %p138 = por %p136, %p137
      %p139 = scmp.le.s32.totalorder 1, %s17
      %p140 = scmp.lt.s32.totalorder %s17, 5
      %p141 = pnand %p139, %p140
      %p142 = pneg %p141
      // Predicated region
      $region9: #{tpu_custom_call.1} parent=5 // pred_check
        _
      $region10: #{tpu_custom_call.1} parent=5 // pred_check_branch
        %144 = sbr.rel (%p141) target = $region12
      $region11: #{tpu_custom_call.1} parent=5 // pred_region
        %s145 = ssub.s32 %s17, 1
      $region12: #{tpu_custom_call.1} parent=5 // pred_fallthru
        _
      %p146 = scmp.lt.s32.totalorder %s17, 4
      // Predicated region
      $region13: #{tpu_custom_call.1} parent=5 // pred_check
        %p147 = pneg %p146
      $region14: #{tpu_custom_call.1} parent=5 // pred_check_branch
        %149 = sbr.rel (%p147) target = $region16
      $region15: #{tpu_custom_call.1} parent=5 // pred_region
        // Predicated region
        $region17: #{tpu_custom_call.1} parent=15 // pred_check
          %p150 = pneg %p67
        $region18: #{tpu_custom_call.1} parent=15 // pred_check_branch
          %152 = sbr.rel (%p150) target = $region20
        $region19: #{tpu_custom_call.1} parent=15 // pred_region
          %s153 = sand.u32 %s57, 1
          %s154 = scalar_lea.sflag [#allocation3], %s153
          %s155 = sand.u32 %s57, 1
          %s156 = smul.addr %s155, 8
          %s157 = scalar_lea.vmem [#allocation2], %s156
          %s158 = smul.u32 2, %s24
          %s160 = ssub.s32 128, 128
          %161 = vsyncadd %s154, %s160
          %s162 = sadd.s32 %s27, %s158
          %s163 = smul.addr %s26, 2
          %s164 = sadd.s32 %s162, %s163
          %s165 = smul.addr %s164, 64
          %s166 = scalar_lea.hbm %s0, %s165
          %s167 = sshll.u32 %s157, 4
          %s168 = int_to_ptr.vmem [resolvable:$true] %s167
          %173 = dma.hbm_to_vmem [thread:$0]  %s166, 128, %s168, %s154, 64, 64, 4
        $region20: #{tpu_custom_call.1} parent=15 // pred_fallthru
          _
        // Predicated region
        $region21: #{tpu_custom_call.1} parent=15 // pred_check
          %p174 = pneg %p97
        $region22: #{tpu_custom_call.1} parent=15 // pred_check_branch
          %176 = sbr.rel (%p174) target = $region24
        $region23: #{tpu_custom_call.1} parent=15 // pred_region
          %s177 = sand.u32 %s87, 1
          %s178 = scalar_lea.sflag [#allocation6], %s177
          %s179 = sand.u32 %s87, 1
          %s180 = smul.addr %s179, 64
          %s181 = scalar_lea.vmem [#allocation5], %s180
          %s182 = smul.u32 16, %s25
          %s184 = ssub.s32 1024, 1024
          %185 = vsyncadd %s178, %s184
          %s186 = sadd.s32 %s27, %s182
          %s187 = smul.addr %s26, 32
          %s188 = sadd.s32 %s186, %s187
          %s189 = smul.addr %s188, 64
          %s190 = scalar_lea.hbm %s1, %s189
          %s191 = sshll.u32 %s181, 4
          %s192 = int_to_ptr.vmem [resolvable:$true] %s191
          %197 = dma.hbm_to_vmem [thread:$0]  %s190, 1024, %s192, %s178, 64, 64, 4
        $region24: #{tpu_custom_call.1} parent=15 // pred_fallthru
          _
      $region16: #{tpu_custom_call.1} parent=5 // pred_fallthru
        _
      %p198 = scmp.le.s32.totalorder 1, %s17
      %p199 = scmp.lt.s32.totalorder %s17, 5
      %p200 = pnand %p198, %p199
      %p201 = pneg %p200
      // Predicated region
      $region25: #{tpu_custom_call.1} parent=5 // pred_check
        _
      $region26: #{tpu_custom_call.1} parent=5 // pred_check_branch
        %203 = sbr.rel (%p200) target = $region28
      $region27: #{tpu_custom_call.1} parent=5 // pred_region
        %s204 = ssub.s32 %s17, 1
        %s205 = sand.u32 %s60, 1
        %s206 = scalar_lea.sflag [#allocation3], %s205
        %s207 = sand.u32 %s60, 1
        %s208 = smul.addr %s207, 8
        %s209 = scalar_lea.vmem [#allocation2], %s208
        // Predicated region
        $region29: #{tpu_custom_call.1} parent=27 // pred_check
          %p210 = pneg %p73
        $region30: #{tpu_custom_call.1} parent=27 // pred_check_branch
          %212 = sbr.rel (%p210) target = $region32
        $region31: #{tpu_custom_call.1} parent=27 // pred_region
          %213 = dma.done %s206, 128
        $region32: #{tpu_custom_call.1} parent=27 // pred_fallthru
          _
        %s214 = sand.u32 %s90, 1
        %s215 = scalar_lea.sflag [#allocation6], %s214
        %s216 = sand.u32 %s90, 1
        %s217 = smul.addr %s216, 64
        %s218 = scalar_lea.vmem [#allocation5], %s217
        // Predicated region
        $region33: #{tpu_custom_call.1} parent=27 // pred_check
          %p219 = pneg %p103
        $region34: #{tpu_custom_call.1} parent=27 // pred_check_branch
          %221 = sbr.rel (%p219) target = $region36
        $region35: #{tpu_custom_call.1} parent=27 // pred_region
          %222 = dma.done %s215, 1024
        $region36: #{tpu_custom_call.1} parent=27 // pred_fallthru
          _
        %s223 = sand.u32 %s60, 1
        %s224 = scalar_lea.sflag [#allocation3], %s223
        %s225 = sand.u32 %s60, 1
        %s226 = smul.addr %s225, 8
        %s227 = scalar_lea.vmem [#allocation2], %s226
        %p228 = pneg %p73
        %p229 = pneg %p70
        %s230 = sand.u32 %s90, 1
        %s231 = scalar_lea.sflag [#allocation6], %s230
        %s232 = sand.u32 %s90, 1
        %s233 = smul.addr %s232, 64
        %s234 = scalar_lea.vmem [#allocation5], %s233
        %p235 = pneg %p103
        %p236 = pneg %p100
        %p237 = pneg %p131
        %p238 = pneg %p128
        %s239 = sand.u32 %s118, 1
        %s240 = scalar_lea.sflag [#allocation4], %s239
        %s241 = sand.u32 %s118, 1
        %s242 = smul.addr %s241, 16
        %s243 = scalar_lea.vmem [#allocation7], %s242
        %s244 = smul.u32 2, %s28
        %s245 = smul.u32 16, %s29
        %s246 = smul.u32 2, %s28
        %p248 = scmp.eq.s32.totalorder %s30, 0
        %p249 = scmp.eq.s32.totalorder %s31, 0
        %p250 = pnand %p248, %p249
        %p251 = pneg %p250
        %v252 = vld [vmem:[%s209] sm:$0xf]
        %v253 = vld [vmem:[%s209 + $0x4] sm:$0xf]
        %v254 = vld [vmem:[%s218] sm:$0xf]
        %v255 = vld [vmem:[%s218 + $0x4] sm:$0xf]
        %v256 = vld [vmem:[%s218 + $0x8] sm:$0xf]
        %v257 = vld [vmem:[%s218 + $0xc] sm:$0xf]
        %v258 = vld [vmem:[%s218 + $0x10] sm:$0xf]
        %v259 = vld [vmem:[%s218 + $0x14] sm:$0xf]
        %v260 = vld [vmem:[%s218 + $0x18] sm:$0xf]
        %v261 = vld [vmem:[%s218 + $0x1c] sm:$0xf]
        %v262 = vld [vmem:[%s218 + $0x20] sm:$0xf]
        %v263 = vld [vmem:[%s218 + $0x24] sm:$0xf]
        %v264 = vld [vmem:[%s218 + $0x28] sm:$0xf]
        %v265 = vld [vmem:[%s218 + $0x2c] sm:$0xf]
        %v266 = vld [vmem:[%s218 + $0x30] sm:$0xf]
        %v267 = vld [vmem:[%s218 + $0x34] sm:$0xf]
        %v268 = vld [vmem:[%s218 + $0x38] sm:$0xf]
        %v269 = vld [vmem:[%s218 + $0x3c] sm:$0xf]
        %v272 = vunpack.c.l.b16 %v252
        %v273 = vunpack.c.l.b16 %v253
        %v274 = vpack.c.b16 %v273, %v272
        %v292 = vunpack.c.l.b16 %v254
        %v293 = vunpack.c.l.b16 %v255
        %v294 = vunpack.c.l.b16 %v256
        %v295 = vunpack.c.l.b16 %v257
        %v296 = vunpack.c.l.b16 %v258
        %v297 = vunpack.c.l.b16 %v259
        %v298 = vunpack.c.l.b16 %v260
        %v299 = vunpack.c.l.b16 %v261
        %v300 = vunpack.c.l.b16 %v262
        %v301 = vunpack.c.l.b16 %v263
        %v302 = vunpack.c.l.b16 %v264
        %v303 = vunpack.c.l.b16 %v265
        %v304 = vunpack.c.l.b16 %v266
        %v305 = vunpack.c.l.b16 %v267
        %v306 = vunpack.c.l.b16 %v268
        %v307 = vunpack.c.l.b16 %v269
        %v308 = vpack.c.b16 %v293, %v292
        %v309 = vpack.c.b16 %v295, %v294
        %v310 = vpack.c.b16 %v297, %v296
        %v311 = vpack.c.b16 %v299, %v298
        %v312 = vpack.c.b16 %v301, %v300
        %v313 = vpack.c.b16 %v303, %v302
        %v314 = vpack.c.b16 %v305, %v304
        %v315 = vpack.c.b16 %v307, %v306
        %324 = vmatprep.subr.bf16.mxu0 0
        %325 = vmatpush1.bf16.xpose.msra.mxu0 %v315
        %326 = vmatprep.subr.bf16.mxu0 0
        %327 = vmatpush1.bf16.xpose.msra.mxu0 %v314
        %328 = vmatprep.subr.bf16.mxu0 0
        %329 = vmatpush1.bf16.xpose.msra.mxu0 %v313
        %330 = vmatprep.subr.bf16.mxu0 0
        %331 = vmatpush1.bf16.xpose.msra.mxu0 %v312
        %332 = vmatprep.subr.bf16.mxu0 0
        %333 = vmatpush1.bf16.xpose.msra.mxu0 %v311
        %334 = vmatprep.subr.bf16.mxu0 0
        %335 = vmatpush1.bf16.xpose.msra.mxu0 %v310
        %336 = vmatprep.subr.bf16.mxu0 0
        %337 = vmatpush1.bf16.xpose.msra.mxu0 %v309
        %338 = vmatprep.subr.bf16.mxu0 0
        %339 = vmatpush1.bf16.xpose.msra.mxu0 %v308
        %340 = vmatprep.subr.bf16.mxu0 0
        %341 = vmatpush2.bf16.xpose.msra.mxu0 0
        %342 = vmatprep.subr.bf16.mxu0 0
        %343 = vmatpush2.bf16.xpose.msra.mxu0 0
        %344 = vmatprep.subr.bf16.mxu0 0
        %345 = vmatpush2.bf16.xpose.msra.mxu0 0
        %346 = vmatprep.subr.bf16.mxu0 0
        %347 = vmatpush2.bf16.xpose.msra.mxu0 0
        %348 = vmatprep.subr.bf16.mxu0 0
        %349 = vmatpush2.bf16.xpose.msra.mxu0 0
        %350 = vmatprep.subr.bf16.mxu0 0
        %351 = vmatpush2.bf16.xpose.msra.mxu0 0
        %352 = vmatprep.subr.bf16.mxu0 0
        %353 = vmatpush2.bf16.xpose.msra.mxu0 0
        %354 = vmatprep.subr.bf16.mxu0 0
        %355 = vmatpush2.bf16.xpose.msra.mxu0 0
        %356 = vmatprep.mubr.bf16.mxu0 0
        %357 = vmatmul.mubr.bf16.gmra.mxu0 %v274
        %v358 = vpop.f32.mrf.mxu0
        %v359 = vadd.f32 0.0, %v358
        %v360 = vpop.f32.mrf.mxu0
        %v361 = vpop.f32.mrf.mxu0
        %v362 = vadd.f32 0.0, %v361
        %v363 = vpop.f32.mrf.mxu0
        %364 = vdwg.mxu0
        // Predicated region
        $region37: #{tpu_custom_call.1} parent=27 // pred_check
          _
        $region38: #{tpu_custom_call.1} parent=27 // pred_check_branch
          %366 = sbr.rel (%p250) target = $region40
        $region39: #{tpu_custom_call.1} parent=27 // pred_region
          %367 = vst [vmem:[%s243] sm:$0xff] %v359
          %368 = vst [vmem:[%s243 + $0x8] sm:$0xff] %v362
        $region40: #{tpu_custom_call.1} parent=27 // pred_fallthru
          _
        %p369 = pneg %p251
        // Predicated region
        $region41: #{tpu_custom_call.1} parent=27 // pred_check
          _
        $region42: #{tpu_custom_call.1} parent=27 // pred_check_branch
          %371 = sbr.rel (%p251) target = $region44
        $region43: #{tpu_custom_call.1} parent=27 // pred_region
          %v372 = vld [vmem:[%s243] sm:$0xff]
          %v373 = vld [vmem:[%s243 + $0x8] sm:$0xff]
          %v374 = vadd.f32 %v372, %v359
          %v375 = vadd.f32 %v373, %v362
          %376 = vst [vmem:[%s243] sm:$0xff] %v374
          %377 = vst [vmem:[%s243 + $0x8] sm:$0xff] %v375
        $region44: #{tpu_custom_call.1} parent=27 // pred_fallthru
          _
        %s378 = sand.u32 %s118, 1
        %s379 = scalar_lea.sflag [#allocation4], %s378
        %s380 = sand.u32 %s118, 1
        %s381 = smul.addr %s380, 16
        %s382 = scalar_lea.vmem [#allocation7], %s381
        // Predicated region
        $region45: #{tpu_custom_call.1} parent=27 // pred_check
          %p383 = pneg %p128
        $region46: #{tpu_custom_call.1} parent=27 // pred_check_branch
          %385 = sbr.rel (%p383) target = $region48
        $region47: #{tpu_custom_call.1} parent=27 // pred_region
          %s386 = smul.u32 2, %s28
          %s388 = ssub.s32 256, 256
          %389 = vsyncadd %s379, %s388
          %s390 = smul.addr %s386, 2
          %s391 = sadd.s32 %s29, %s390
          %s392 = smul.addr %s391, 128
          %s393 = scalar_lea.hbm %s2, %s392
          %s394 = sshll.u32 %s382, 4
          %s395 = int_to_ptr.vmem [resolvable:$true] %s394
          %400 = dma.vmem_to_hbm [thread:$0]  %s395, 256, %s393, %s379, 128, 256, 8
        $region48: #{tpu_custom_call.1} parent=27 // pred_fallthru
          _
      $region28: #{tpu_custom_call.1} parent=5 // pred_fallthru
        _
      %p401 = scmp.le.s32.totalorder 2, %s17
      // Predicated region
      $region49: #{tpu_custom_call.1} parent=5 // pred_check
        %p402 = pneg %p401
      $region50: #{tpu_custom_call.1} parent=5 // pred_check_branch
        %404 = sbr.rel (%p402) target = $region52
      $region51: #{tpu_custom_call.1} parent=5 // pred_region
        %s405 = ssub.s32 %s17, 2
        // Predicated region
        $region53: #{tpu_custom_call.1} parent=51 // pred_check
          %p406 = pneg %p134
        $region54: #{tpu_custom_call.1} parent=51 // pred_check_branch
          %408 = sbr.rel (%p406) target = $region56
        $region55: #{tpu_custom_call.1} parent=51 // pred_region
          %s409 = sand.u32 %s119, 1
          %s410 = scalar_lea.sflag [#allocation4], %s409
          %s411 = sand.u32 %s119, 1
          %s412 = smul.addr %s411, 16
          %s413 = scalar_lea.vmem [#allocation7], %s412
          %414 = dma.done %s410, 256
        $region56: #{tpu_custom_call.1} parent=51 // pred_fallthru
          _
      $region52: #{tpu_custom_call.1} parent=5 // pred_fallthru
        _
    $region6: #{tpu_custom_call.1} parent=1 // loop_footer
      %s21 = sadd.s32 1, %s17
    $region7: #{tpu_custom_call.1} parent=1 // loop_footer_branch
      %16 = sbr.rel target = $region3
    $region8: #{tpu_custom_call.1} parent=1 // loop_exit
      _
    %415 = vsyncpa [#allocation3], 1
    %s416 = scalar_lea.sflag [#allocation3], 1
    %417 = vsyncpa %s416, 1
    %418 = vsyncpa [#allocation6], 1
    %s419 = scalar_lea.sflag [#allocation6], 1
    %420 = vsyncpa %s419, 1
    %421 = vsyncpa [#allocation4], 1
    %s422 = scalar_lea.sflag [#allocation4], 1
    %423 = vsyncpa %s422, 1

</llo_original>
